<compile_context>
chip_gen: v7x
topology: tpu7x:2x2x1
jax: 0.10.0
libtpu: 0.0.40
codegen_flags: <defaults>
</compile_context>

<pallas_src>
import functools

import numpy as np
import jax
import jax.numpy as jnp
from jax.experimental import pallas as pl
from jax.experimental.pallas import tpu as pltpu

NUM_BLOCKS = 3      # TemporalConvNet(d_ff, [d_model, d_model, d_model])
LANE = 128          # lane width; flattened sequence axis is padded to a multiple of this
MARGIN = 128        # zero margin (lanes) of the causal-shift scratch; >= max dilation (4)


def _round_up(n, m):
    return ((n + m - 1) // m) * m


# ----------------------------- Pallas kernel -------------------------------------------
def _tcn_slabs_kernel(x_ref, w_ref, b_ref, t_ref, o_ref, shift_ref):
    """Full TemporalConvNet over one slab of flattened sequences (channel-major).

    x_ref:     (C, S)        all sequences of this slab back-to-back along the lane axis
    w_ref:     (6, C, 2C)    fused taps per conv: [:, :, :C] tap at t-dil, [:, :, C:] at t
                             (weight_norm already folded into the weights)
    b_ref:     (6, C, 1)     biases
    t_ref:     (1, S) int32  time index of each column within its own sequence
    o_ref:     (C, S)
    shift_ref: (C, MARGIN+S) f32 scratch for the causal shift (margin stays zero)
    """
    C, S = x_ref.shape
    # Zero only the margin; every other scratch column is overwritten before it is read.
    # Re-done every grid step (the scratch is reused across slabs / cores).
    shift_ref[:, :MARGIN] = jnp.zeros((C, MARGIN), jnp.float32)

    t_idx = t_ref[...]                                   # (1, S) int32
    h = x_ref[...].astype(jnp.float32)
    for blk in range(NUM_BLOCKS):
        dil = 2 ** blk
        res = h
        # columns whose within-sequence time index is < dil read causal zero padding
        keep = (t_idx >= dil).astype(jnp.float32)        # (1, S), broadcasts over C rows
        for cv in range(2):
            i = blk * 2 + cv
            # causal shift via zero-margined scratch: static, sequence-boundary safe
            shift_ref[:, MARGIN:] = h
            h_prev = shift_ref[:, MARGIN - dil:MARGIN - dil + S] * keep
            # fused-tap matmul: (C, 2C) @ (2C, S)
            h_cat = jnp.concatenate([h_prev, h], axis=0)                 # (2C, S)
            y = (jnp.dot(w_ref[i], h_cat, preferred_element_type=jnp.float32)
                 + b_ref[i])
            h = jnp.maximum(y, 0.0)          # Dropout is identity in eval-mode forward
        # residual add (no downsample conv since C_in == C_out) + ReLU
        h = jnp.maximum(h + res, 0.0)
    o_ref[...] = h.astype(o_ref.dtype)


@functools.lru_cache(maxsize=None)
def _build_tcn_call(n_slab, C, S, dtype_name):
    """Build (and cache) the pallas_call for a given slab geometry."""
    dtype = jnp.dtype(dtype_name)
    call = pl.pallas_call(
        _tcn_slabs_kernel,
        out_shape=jax.ShapeDtypeStruct((n_slab, C, S), dtype),
        grid=(n_slab,),
        in_specs=[
            pl.BlockSpec((None, C, S), lambda s: (s, 0, 0)),                     # x
            pl.BlockSpec((None, 2 * NUM_BLOCKS, C, 2 * C), lambda s: (s, 0, 0, 0)),  # w
            pl.BlockSpec((None, 2 * NUM_BLOCKS, C, 1), lambda s: (s, 0, 0, 0)),      # b
            pl.BlockSpec((None, 1, S), lambda s: (s, 0, 0)),                     # t_idx
        ],
        out_specs=pl.BlockSpec((None, C, S), lambda s: (s, 0, 0)),
        scratch_shapes=[pltpu.VMEM((C, MARGIN + S), jnp.float32)],
        compiler_params=pltpu.CompilerParams(
            # v7x: one slab per TensorCore; v5e/v6e: plain sequential grid.
            dimension_semantics=("parallel",)),
    )
    return jax.jit(call)


def tcn_slabs_pallas(x_all, t_all, w_all, b_all):
    """x_all: (2, C, S_pad) channel-major slabs -> (2, C, S_pad)."""
    n_slab, C, S = x_all.shape
    fn = _build_tcn_call(n_slab, C, S, str(x_all.dtype))
    return fn(x_all, w_all, b_all, t_all)


def tcn_slabs_reference(x_all, t_all, w_all, b_all):
    """Pure-JAX mirror of the kernel math (explicit zero-prepend shift) for validation."""
    n_slab, C, S = x_all.shape
    outs = []
    for s in range(n_slab):
        h = x_all[s].astype(jnp.float32)
        t_idx = t_all[s]                                 # (1, S)
        for blk in range(NUM_BLOCKS):
            dil = 2 ** blk
            res = h
            keep = (t_idx >= dil).astype(jnp.float32)
            for cv in range(2):
                i = blk * 2 + cv
                h_prev = jnp.pad(h[:, :S - dil], ((0, 0), (dil, 0))) * keep
                h_cat = jnp.concatenate([h_prev, h], axis=0)
                y = jnp.dot(w_all[s, i], h_cat,
                            precision=jax.lax.Precision.HIGHEST) + b_all[s, i]
                h = jnp.maximum(y, 0.0)
            h = jnp.maximum(h + res, 0.0)
        outs.append(h)
    return jnp.stack(outs, axis=0).astype(x_all.dtype)


# ----------------------------- plain-JAX glue -------------------------------------------
def fft_for_period(x, k):
    """Mirror of FFT_for_Period (data-dependent periods synced to host)."""
    xf = jnp.fft.rfft(x, axis=1)
    amp = jnp.abs(xf)                                    # (B, T//2+1, N)
    freq = amp.mean(axis=0).mean(axis=-1)                # (T//2+1,)
    freq = freq.at[0].set(0.0)
    _, top_idx = jax.lax.top_k(freq, k)
    top_idx = np.asarray(jax.device_get(top_idx))        # host sync, like .cpu().numpy()
    period_weight = amp.mean(axis=-1)[:, top_idx]        # (B, k), original indices
    # guard (review concern): index 0 can still be selected if k exceeds the number of
    # informative frequencies -> would give period = T // 0
    safe_idx = np.where(top_idx == 0, 1, top_idx)
    period = x.shape[1] // safe_idx
    return period, period_weight


def _adaptive_pool_matrix(in_size, out_size):
    """Row i averages input bins [floor(i*in/out), ceil((i+1)*in/out)) — matches
    nn.AdaptiveAvgPool2d along the H axis."""
    m = np.zeros((out_size, in_size), np.float32)
    for i in range(out_size):
        s = (i * in_size) // out_size
        e = -((-(i + 1) * in_size) // out_size)
        m[i, s:e] = 1.0 / (e - s)
    return jnp.asarray(m)


def timesblock_forward(x, params, seq_len, pred_len, top_k,
                       tcn_slabs_fn=tcn_slabs_pallas):
    B, T, N = x.shape
    assert T == seq_len + pred_len
    period_list, period_weight = fft_for_period(x, top_k)
    w_all, b_all = params["w"], params["b"]

    res_list = []
    for i in range(top_k):
        period = int(period_list[i])
        if T % period != 0:
            length = (T // period + 1) * period
            pad = jnp.zeros((B, length - T, N), x.dtype)
            out = jnp.concatenate([x, pad], axis=1)
        else:
            length = T
            out = x
        fnum = length // period
        x4 = out.reshape(B, fnum, period, N)             # (B, F, P, N); t = f*period + p

        # --- build the two channel-major flattened slabs (each sequence is a contiguous
        #     lane range; S padded to a multiple of 128 so the kernel shape is reused) ---
        S = B * length
        S_pad = _round_up(S, LANE)
        intra = x4.transpose(3, 0, 2, 1).reshape(N, S)   # sequences over F, one per (b,p)
        inter = x4.transpose(3, 0, 1, 2).reshape(N, S)   # sequences over P, one per (b,f)
        if S_pad != S:
            zc = jnp.zeros((N, S_pad - S), x.dtype)
            intra = jnp.concatenate([intra, zc], axis=1)
            inter = jnp.concatenate([inter, zc], axis=1)
        x_all = jnp.stack([intra, inter], axis=0)        # (2, N, S_pad)
        t_np = np.stack([np.arange(S_pad) % fnum,
                         np.arange(S_pad) % period]).astype(np.int32)
        t_all = jnp.asarray(t_np)[:, None, :]            # (2, 1, S_pad)

        # --- one pallas_call covers both TCNs (intra + inter) for this period ---
        y_all = tcn_slabs_fn(x_all, t_all, w_all, b_all)  # (2, N, S_pad)
        intra4 = y_all[0, :, :S].reshape(N, B, period, fnum).transpose(1, 0, 3, 2)
        inter4 = y_all[1, :, :S].reshape(N, B, fnum, period).transpose(1, 0, 2, 3)
        # both (B, N, F, P), matching torch.stack of the per-slice TCN outputs

        # AdaptiveAvgPool2d((T, 1)): mean over P (W -> 1), adaptive bins over F (H -> T)
        # TODO(synk): fuse this pooled reduction into the kernel epilogue to avoid the
        # (2, N, S) HBM round trip, and chunk the S axis across extra grid steps for very
        # large B*T (v7x 64 MiB VMEM budget).
        pool = _adaptive_pool_matrix(fnum, T)                               # (T, F)
        intra_p = jnp.einsum("tf,bnf->bnt", pool, intra4.mean(axis=3))      # (B, N, T)
        inter_p = jnp.einsum("tf,bnf->bnt", pool, inter4.mean(axis=3))

        # permute(0,2,3,1).reshape(B,-1) of (B,N,T,1) then reshape(B,-1,N) == (B, T, N)
        # intraperiod_net / interperiod_net = Dropout(0.2) + ReLU  (eval-mode dropout)
        o = (jnp.maximum(intra_p.transpose(0, 2, 1), 0.0)
             + jnp.maximum(inter_p.transpose(0, 2, 1), 0.0))
        res_list.append(o[:, :T, :])

    res = jnp.stack(res_list, axis=-1)                   # (B, T, N, k)
    pw = jax.nn.softmax(period_weight, axis=1)           # (B, k)
    return jnp.sum(res * pw[:, None, None, :], axis=-1) + x


# ----------------------------- main ------------------------------------------------------
if __name__ == "__main__":
    # small config: seq_len=7, pred_len=3 -> T=10, d_model = d_ff = 16, top_k=3, B=2
    seq_len, pred_len, d_model, top_k = 7, 3, 16, 3
    B = 2
    T = seq_len + pred_len

    key = jax.random.PRNGKey(0)
    kx, kw, kb = jax.random.split(key, 3)
    x = jax.random.normal(kx, (B, T, d_model), jnp.float32)

    # weights: [slab (0 = intra TCN, 1 = inter TCN), conv layer, C_out, 2*C_in]
    # columns [:C] = tap applied at t - dilation, [C:] = tap applied at t
    # (i.e. the weight_norm-folded PyTorch conv weight w(C,C,2) packed as [w[..,0]|w[..,1]])
    params = {
        "w": jax.random.normal(kw, (2, 2 * NUM_BLOCKS, d_model, 2 * d_model),
                               jnp.float32) * 0.1,
        "b": jax.random.normal(kb, (2, 2 * NUM_BLOCKS, d_model, 1),
                               jnp.float32) * 0.1,
    }

    out = timesblock_forward(x, params, seq_len, pred_len, top_k,
                             tcn_slabs_fn=tcn_slabs_pallas)
    out = jax.block_until_ready(out)
    assert out.shape == (B, T, d_model), out.shape
    assert bool(jnp.all(jnp.isfinite(out)))

    # validate the Pallas TCN against a pure-JAX reference of the same math
    ref = jax.block_until_ready(
        timesblock_forward(x, params, seq_len, pred_len, top_k,
                           tcn_slabs_fn=tcn_slabs_reference))
    err = float(jnp.max(jnp.abs(out - ref)))
    assert err < 1e-2, f"Pallas/reference mismatch: max abs err = {err}"

    print("KERNEL_OK")
</pallas_src>

<mosaic_0001>
module attributes {stable_mosaic.version = 11 : i64} {
  func.func @_tcn_slabs_kernel(%arg0: i32, %arg1: memref<1x16x128xf32, #tpu.memory_space<vmem>>, %arg2: memref<1x6x16x32xf32, #tpu.memory_space<vmem>>, %arg3: memref<1x6x16x1xf32, #tpu.memory_space<vmem>>, %arg4: memref<1x1x128xi32, #tpu.memory_space<vmem>>, %arg5: memref<1x16x128xf32, #tpu.memory_space<vmem>>, %arg6: memref<16x256xf32, #tpu.memory_space<vmem>>) attributes {dimension_semantics = [#tpu.dimension_semantics<parallel>], iteration_bounds = array<i64: 2>, scalar_prefetch = 0 : i64, scratch_operands = 1 : i64, tpu.core_type = #tpu.core_type<tc>, window_params = [{transform_indices = @transform_0, window_bounds = array<i64: 1, 16, 128>}, {transform_indices = @transform_1, window_bounds = array<i64: 1, 6, 16, 32>}, {transform_indices = @transform_2, window_bounds = array<i64: 1, 6, 16, 1>}, {transform_indices = @transform_3, window_bounds = array<i64: 1, 1, 128>}, {transform_indices = @transform_4, window_bounds = array<i64: 1, 16, 128>}]} {
    %cst = arith.constant 0.000000e+00 : f32
    %0 = vector.broadcast %cst : f32 to vector<16x128xf32>
    %c0 = arith.constant 0 : index
    %c0_0 = arith.constant 0 : index
    %1 = vector.load %arg6[%c0, %c0_0] : memref<16x256xf32, #tpu.memory_space<vmem>>, vector<16x128xf32>
    tpu.vector_store %arg6[%c0, %c0_0], %0 {strides = array<i32>} : memref<16x256xf32, #tpu.memory_space<vmem>>, vector<16x128xf32>,
    %c0_1 = arith.constant 0 : index
    %c0_2 = arith.constant 0 : index
    %c0_3 = arith.constant 0 : index
    %2 = vector.load %arg4[%c0_1, %c0_2, %c0_3] : memref<1x1x128xi32, #tpu.memory_space<vmem>>, vector<1x1x128xi32>
    %3 = vector.shape_cast %2 : vector<1x1x128xi32> to vector<1x128xi32>
    %c0_4 = arith.constant 0 : index
    %c0_5 = arith.constant 0 : index
    %c0_6 = arith.constant 0 : index
    %4 = vector.load %arg1[%c0_4, %c0_5, %c0_6] : memref<1x16x128xf32, #tpu.memory_space<vmem>>, vector<1x16x128xf32>
    %5 = vector.shape_cast %4 : vector<1x16x128xf32> to vector<16x128xf32>
    %c1_i32 = arith.constant 1 : i32
    %6 = vector.broadcast %c1_i32 : i32 to vector<1x128xi32>
    %7 = arith.cmpi sge, %3, %6 : vector<1x128xi32>
    %8 = arith.extui %7 : vector<1x128xi1> to vector<1x128xi32>
    %9 = arith.sitofp %8 : vector<1x128xi32> to vector<1x128xf32>
    %c0_7 = arith.constant 0 : index
    %c128 = arith.constant 128 : index
    %10 = vector.load %arg6[%c0_7, %c128] : memref<16x256xf32, #tpu.memory_space<vmem>>, vector<16x128xf32>
    tpu.vector_store %arg6[%c0_7, %c128], %5 {strides = array<i32>} : memref<16x256xf32, #tpu.memory_space<vmem>>, vector<16x128xf32>,
    %c0_8 = arith.constant 0 : index
    %c127 = arith.constant 127 : index
    %11 = vector.load %arg6[%c0_8, %c127] : memref<16x256xf32, #tpu.memory_space<vmem>>, vector<16x128xf32>
    %12 = vector.broadcast %9 : vector<1x128xf32> to vector<16x128xf32>
    %13 = arith.mulf %11, %12 : vector<16x128xf32>
    %14 = tpu.concatenate %13, %5 in 0 : vector<16x128xf32>, vector<16x128xf32> -> vector<32x128xf32>
    %c0_9 = arith.constant 0 : index
    %c0_10 = arith.constant 0 : index
    %c0_11 = arith.constant 0 : index
    %c0_12 = arith.constant 0 : index
    %15 = vector.load %arg2[%c0_9, %c0_10, %c0_11, %c0_12] : memref<1x6x16x32xf32, #tpu.memory_space<vmem>>, vector<1x1x16x32xf32>
    %16 = vector.shape_cast %15 : vector<1x1x16x32xf32> to vector<16x32xf32>
    %cst_13 = arith.constant dense<0.000000e+00> : vector<16x128xf32>
    %17 = tpu.matmul %16, %14, %cst_13 {dimension_numbers = #tpu.dot_dimension_numbers<[1], [0], [0], [1], [0, 0, 1, 1], [], []>} : vector<16x32xf32>, vector<32x128xf32>, vector<16x128xf32> -> vector<16x128xf32>
    %c0_14 = arith.constant 0 : index
    %c0_15 = arith.constant 0 : index
    %c0_16 = arith.constant 0 : index
    %c0_17 = arith.constant 0 : index
    %18 = vector.load %arg3[%c0_14, %c0_15, %c0_16, %c0_17] : memref<1x6x16x1xf32, #tpu.memory_space<vmem>>, vector<1x1x16x1xf32>
    %19 = vector.shape_cast %18 : vector<1x1x16x1xf32> to vector<16x1xf32>
    %20 = vector.broadcast %19 : vector<16x1xf32> to vector<16x128xf32>
    %21 = arith.addf %17, %20 : vector<16x128xf32>
    %cst_18 = arith.constant 0.000000e+00 : f32
    %22 = vector.broadcast %cst_18 : f32 to vector<16x128xf32>
    %23 = arith.maximumf %21, %22 : vector<16x128xf32>
    %c0_19 = arith.constant 0 : index
    %c128_20 = arith.constant 128 : index
    %24 = vector.load %arg6[%c0_19, %c128_20] : memref<16x256xf32, #tpu.memory_space<vmem>>, vector<16x128xf32>
    tpu.vector_store %arg6[%c0_19, %c128_20], %23 {strides = array<i32>} : memref<16x256xf32, #tpu.memory_space<vmem>>, vector<16x128xf32>,
    %c0_21 = arith.constant 0 : index
    %c127_22 = arith.constant 127 : index
    %25 = vector.load %arg6[%c0_21, %c127_22] : memref<16x256xf32, #tpu.memory_space<vmem>>, vector<16x128xf32>
    %26 = vector.broadcast %9 : vector<1x128xf32> to vector<16x128xf32>
    %27 = arith.mulf %25, %26 : vector<16x128xf32>
    %28 = tpu.concatenate %27, %23 in 0 : vector<16x128xf32>, vector<16x128xf32> -> vector<32x128xf32>
    %c0_23 = arith.constant 0 : index
    %c1 = arith.constant 1 : index
    %c0_24 = arith.constant 0 : index
    %c0_25 = arith.constant 0 : index
    %29 = vector.load %arg2[%c0_23, %c1, %c0_24, %c0_25] : memref<1x6x16x32xf32, #tpu.memory_space<vmem>>, vector<1x1x16x32xf32>
    %30 = vector.shape_cast %29 : vector<1x1x16x32xf32> to vector<16x32xf32>
    %cst_26 = arith.constant dense<0.000000e+00> : vector<16x128xf32>
    %31 = tpu.matmul %30, %28, %cst_26 {dimension_numbers = #tpu.dot_dimension_numbers<[1], [0], [0], [1], [0, 0, 1, 1], [], []>} : vector<16x32xf32>, vector<32x128xf32>, vector<16x128xf32> -> vector<16x128xf32>
    %c0_27 = arith.constant 0 : index
    %c1_28 = arith.constant 1 : index
    %c0_29 = arith.constant 0 : index
    %c0_30 = arith.constant 0 : index
    %32 = vector.load %arg3[%c0_27, %c1_28, %c0_29, %c0_30] : memref<1x6x16x1xf32, #tpu.memory_space<vmem>>, vector<1x1x16x1xf32>
    %33 = vector.shape_cast %32 : vector<1x1x16x1xf32> to vector<16x1xf32>
    %34 = vector.broadcast %33 : vector<16x1xf32> to vector<16x128xf32>
    %35 = arith.addf %31, %34 : vector<16x128xf32>
    %cst_31 = arith.constant 0.000000e+00 : f32
    %36 = vector.broadcast %cst_31 : f32 to vector<16x128xf32>
    %37 = arith.maximumf %35, %36 : vector<16x128xf32>
    %38 = arith.addf %37, %5 : vector<16x128xf32>
    %cst_32 = arith.constant 0.000000e+00 : f32
    %39 = vector.broadcast %cst_32 : f32 to vector<16x128xf32>
    %40 = arith.maximumf %38, %39 : vector<16x128xf32>
    %c2_i32 = arith.constant 2 : i32
    %41 = vector.broadcast %c2_i32 : i32 to vector<1x128xi32>
    %42 = arith.cmpi sge, %3, %41 : vector<1x128xi32>
    %43 = arith.extui %42 : vector<1x128xi1> to vector<1x128xi32>
    %44 = arith.sitofp %43 : vector<1x128xi32> to vector<1x128xf32>
    %c0_33 = arith.constant 0 : index
    %c128_34 = arith.constant 128 : index
    %45 = vector.load %arg6[%c0_33, %c128_34] : memref<16x256xf32, #tpu.memory_space<vmem>>, vector<16x128xf32>
    tpu.vector_store %arg6[%c0_33, %c128_34], %40 {strides = array<i32>} : memref<16x256xf32, #tpu.memory_space<vmem>>, vector<16x128xf32>,
    %c0_35 = arith.constant 0 : index
    %c126 = arith.constant 126 : index
    %46 = vector.load %arg6[%c0_35, %c126] : memref<16x256xf32, #tpu.memory_space<vmem>>, vector<16x128xf32>
    %47 = vector.broadcast %44 : vector<1x128xf32> to vector<16x128xf32>
    %48 = arith.mulf %46, %47 : vector<16x128xf32>
    %49 = tpu.concatenate %48, %40 in 0 : vector<16x128xf32>, vector<16x128xf32> -> vector<32x128xf32>
    %c0_36 = arith.constant 0 : index
    %c2 = arith.constant 2 : index
    %c0_37 = arith.constant 0 : index
    %c0_38 = arith.constant 0 : index
    %50 = vector.load %arg2[%c0_36, %c2, %c0_37, %c0_38] : memref<1x6x16x32xf32, #tpu.memory_space<vmem>>, vector<1x1x16x32xf32>
    %51 = vector.shape_cast %50 : vector<1x1x16x32xf32> to vector<16x32xf32>
    %cst_39 = arith.constant dense<0.000000e+00> : vector<16x128xf32>
    %52 = tpu.matmul %51, %49, %cst_39 {dimension_numbers = #tpu.dot_dimension_numbers<[1], [0], [0], [1], [0, 0, 1, 1], [], []>} : vector<16x32xf32>, vector<32x128xf32>, vector<16x128xf32> -> vector<16x128xf32>
    %c0_40 = arith.constant 0 : index
    %c2_41 = arith.constant 2 : index
    %c0_42 = arith.constant 0 : index
    %c0_43 = arith.constant 0 : index
    %53 = vector.load %arg3[%c0_40, %c2_41, %c0_42, %c0_43] : memref<1x6x16x1xf32, #tpu.memory_space<vmem>>, vector<1x1x16x1xf32>
    %54 = vector.shape_cast %53 : vector<1x1x16x1xf32> to vector<16x1xf32>
    %55 = vector.broadcast %54 : vector<16x1xf32> to vector<16x128xf32>
    %56 = arith.addf %52, %55 : vector<16x128xf32>
    %cst_44 = arith.constant 0.000000e+00 : f32
    %57 = vector.broadcast %cst_44 : f32 to vector<16x128xf32>
    %58 = arith.maximumf %56, %57 : vector<16x128xf32>
    %c0_45 = arith.constant 0 : index
    %c128_46 = arith.constant 128 : index
    %59 = vector.load %arg6[%c0_45, %c128_46] : memref<16x256xf32, #tpu.memory_space<vmem>>, vector<16x128xf32>
    tpu.vector_store %arg6[%c0_45, %c128_46], %58 {strides = array<i32>} : memref<16x256xf32, #tpu.memory_space<vmem>>, vector<16x128xf32>,
    %c0_47 = arith.constant 0 : index
    %c126_48 = arith.constant 126 : index
    %60 = vector.load %arg6[%c0_47, %c126_48] : memref<16x256xf32, #tpu.memory_space<vmem>>, vector<16x128xf32>
    %61 = vector.broadcast %44 : vector<1x128xf32> to vector<16x128xf32>
    %62 = arith.mulf %60, %61 : vector<16x128xf32>
    %63 = tpu.concatenate %62, %58 in 0 : vector<16x128xf32>, vector<16x128xf32> -> vector<32x128xf32>
    %c0_49 = arith.constant 0 : index
    %c3 = arith.constant 3 : index
    %c0_50 = arith.constant 0 : index
    %c0_51 = arith.constant 0 : index
    %64 = vector.load %arg2[%c0_49, %c3, %c0_50, %c0_51] : memref<1x6x16x32xf32, #tpu.memory_space<vmem>>, vector<1x1x16x32xf32>
    %65 = vector.shape_cast %64 : vector<1x1x16x32xf32> to vector<16x32xf32>
    %cst_52 = arith.constant dense<0.000000e+00> : vector<16x128xf32>
    %66 = tpu.matmul %65, %63, %cst_52 {dimension_numbers = #tpu.dot_dimension_numbers<[1], [0], [0], [1], [0, 0, 1, 1], [], []>} : vector<16x32xf32>, vector<32x128xf32>, vector<16x128xf32> -> vector<16x128xf32>
    %c0_53 = arith.constant 0 : index
    %c3_54 = arith.constant 3 : index
    %c0_55 = arith.constant 0 : index
    %c0_56 = arith.constant 0 : index
    %67 = vector.load %arg3[%c0_53, %c3_54, %c0_55, %c0_56] : memref<1x6x16x1xf32, #tpu.memory_space<vmem>>, vector<1x1x16x1xf32>
    %68 = vector.shape_cast %67 : vector<1x1x16x1xf32> to vector<16x1xf32>
    %69 = vector.broadcast %68 : vector<16x1xf32> to vector<16x128xf32>
    %70 = arith.addf %66, %69 : vector<16x128xf32>
    %cst_57 = arith.constant 0.000000e+00 : f32
    %71 = vector.broadcast %cst_57 : f32 to vector<16x128xf32>
    %72 = arith.maximumf %70, %71 : vector<16x128xf32>
    %73 = arith.addf %72, %40 : vector<16x128xf32>
    %cst_58 = arith.constant 0.000000e+00 : f32
    %74 = vector.broadcast %cst_58 : f32 to vector<16x128xf32>
    %75 = arith.maximumf %73, %74 : vector<16x128xf32>
    %c4_i32 = arith.constant 4 : i32
    %76 = vector.broadcast %c4_i32 : i32 to vector<1x128xi32>
    %77 = arith.cmpi sge, %3, %76 : vector<1x128xi32>
    %78 = arith.extui %77 : vector<1x128xi1> to vector<1x128xi32>
    %79 = arith.sitofp %78 : vector<1x128xi32> to vector<1x128xf32>
    %c0_59 = arith.constant 0 : index
    %c128_60 = arith.constant 128 : index
    %80 = vector.load %arg6[%c0_59, %c128_60] : memref<16x256xf32, #tpu.memory_space<vmem>>, vector<16x128xf32>
    tpu.vector_store %arg6[%c0_59, %c128_60], %75 {strides = array<i32>} : memref<16x256xf32, #tpu.memory_space<vmem>>, vector<16x128xf32>,
    %c0_61 = arith.constant 0 : index
    %c124 = arith.constant 124 : index
    %81 = vector.load %arg6[%c0_61, %c124] : memref<16x256xf32, #tpu.memory_space<vmem>>, vector<16x128xf32>
    %82 = vector.broadcast %79 : vector<1x128xf32> to vector<16x128xf32>
    %83 = arith.mulf %81, %82 : vector<16x128xf32>
    %84 = tpu.concatenate %83, %75 in 0 : vector<16x128xf32>, vector<16x128xf32> -> vector<32x128xf32>
    %c0_62 = arith.constant 0 : index
    %c4 = arith.constant 4 : index
    %c0_63 = arith.constant 0 : index
    %c0_64 = arith.constant 0 : index
    %85 = vector.load %arg2[%c0_62, %c4, %c0_63, %c0_64] : memref<1x6x16x32xf32, #tpu.memory_space<vmem>>, vector<1x1x16x32xf32>
    %86 = vector.shape_cast %85 : vector<1x1x16x32xf32> to vector<16x32xf32>
    %cst_65 = arith.constant dense<0.000000e+00> : vector<16x128xf32>
    %87 = tpu.matmul %86, %84, %cst_65 {dimension_numbers = #tpu.dot_dimension_numbers<[1], [0], [0], [1], [0, 0, 1, 1], [], []>} : vector<16x32xf32>, vector<32x128xf32>, vector<16x128xf32> -> vector<16x128xf32>
    %c0_66 = arith.constant 0 : index
    %c4_67 = arith.constant 4 : index
    %c0_68 = arith.constant 0 : index
    %c0_69 = arith.constant 0 : index
    %88 = vector.load %arg3[%c0_66, %c4_67, %c0_68, %c0_69] : memref<1x6x16x1xf32, #tpu.memory_space<vmem>>, vector<1x1x16x1xf32>
    %89 = vector.shape_cast %88 : vector<1x1x16x1xf32> to vector<16x1xf32>
    %90 = vector.broadcast %89 : vector<16x1xf32> to vector<16x128xf32>
    %91 = arith.addf %87, %90 : vector<16x128xf32>
    %cst_70 = arith.constant 0.000000e+00 : f32
    %92 = vector.broadcast %cst_70 : f32 to vector<16x128xf32>
    %93 = arith.maximumf %91, %92 : vector<16x128xf32>
    %c0_71 = arith.constant 0 : index
    %c128_72 = arith.constant 128 : index
    %94 = vector.load %arg6[%c0_71, %c128_72] : memref<16x256xf32, #tpu.memory_space<vmem>>, vector<16x128xf32>
    tpu.vector_store %arg6[%c0_71, %c128_72], %93 {strides = array<i32>} : memref<16x256xf32, #tpu.memory_space<vmem>>, vector<16x128xf32>,
    %c0_73 = arith.constant 0 : index
    %c124_74 = arith.constant 124 : index
    %95 = vector.load %arg6[%c0_73, %c124_74] : memref<16x256xf32, #tpu.memory_space<vmem>>, vector<16x128xf32>
    %96 = vector.broadcast %79 : vector<1x128xf32> to vector<16x128xf32>
    %97 = arith.mulf %95, %96 : vector<16x128xf32>
    %98 = tpu.concatenate %97, %93 in 0 : vector<16x128xf32>, vector<16x128xf32> -> vector<32x128xf32>
    %c0_75 = arith.constant 0 : index
    %c5 = arith.constant 5 : index
    %c0_76 = arith.constant 0 : index
    %c0_77 = arith.constant 0 : index
    %99 = vector.load %arg2[%c0_75, %c5, %c0_76, %c0_77] : memref<1x6x16x32xf32, #tpu.memory_space<vmem>>, vector<1x1x16x32xf32>
    %100 = vector.shape_cast %99 : vector<1x1x16x32xf32> to vector<16x32xf32>
    %cst_78 = arith.constant dense<0.000000e+00> : vector<16x128xf32>
    %101 = tpu.matmul %100, %98, %cst_78 {dimension_numbers = #tpu.dot_dimension_numbers<[1], [0], [0], [1], [0, 0, 1, 1], [], []>} : vector<16x32xf32>, vector<32x128xf32>, vector<16x128xf32> -> vector<16x128xf32>
    %c0_79 = arith.constant 0 : index
    %c5_80 = arith.constant 5 : index
    %c0_81 = arith.constant 0 : index
    %c0_82 = arith.constant 0 : index
    %102 = vector.load %arg3[%c0_79, %c5_80, %c0_81, %c0_82] : memref<1x6x16x1xf32, #tpu.memory_space<vmem>>, vector<1x1x16x1xf32>
    %103 = vector.shape_cast %102 : vector<1x1x16x1xf32> to vector<16x1xf32>
    %104 = vector.broadcast %103 : vector<16x1xf32> to vector<16x128xf32>
    %105 = arith.addf %101, %104 : vector<16x128xf32>
    %cst_83 = arith.constant 0.000000e+00 : f32
    %106 = vector.broadcast %cst_83 : f32 to vector<16x128xf32>
    %107 = arith.maximumf %105, %106 : vector<16x128xf32>
    %108 = arith.addf %107, %75 : vector<16x128xf32>
    %cst_84 = arith.constant 0.000000e+00 : f32
    %109 = vector.broadcast %cst_84 : f32 to vector<16x128xf32>
    %110 = arith.maximumf %108, %109 : vector<16x128xf32>
    %c0_85 = arith.constant 0 : index
    %c0_86 = arith.constant 0 : index
    %c0_87 = arith.constant 0 : index
    %111 = vector.load %arg5[%c0_85, %c0_86, %c0_87] : memref<1x16x128xf32, #tpu.memory_space<vmem>>, vector<1x16x128xf32>
    %112 = vector.shape_cast %111 : vector<1x16x128xf32> to vector<16x128xf32>
    %113 = vector.shape_cast %110 : vector<16x128xf32> to vector<1x16x128xf32>
    tpu.vector_store %arg5[%c0_85, %c0_86, %c0_87], %113 {strides = array<i32>} : memref<1x16x128xf32, #tpu.memory_space<vmem>>, vector<1x16x128xf32>,
    return
  }
  func.func @transform_0(%arg0: i32) -> (i32, i32, i32) {
    %c0_i32 = arith.constant 0 : i32
    %c0_i32_0 = arith.constant 0 : i32
    %c0_i32_1 = arith.constant 0 : i32
    return %arg0, %c0_i32, %c0_i32_0 : i32, i32, i32
  }
  func.func @transform_1(%arg0: i32) -> (i32, i32, i32, i32) {
    %c0_i32 = arith.constant 0 : i32
    %c0_i32_0 = arith.constant 0 : i32
    %c0_i32_1 = arith.constant 0 : i32
    %c0_i32_2 = arith.constant 0 : i32
    return %arg0, %c0_i32, %c0_i32_0, %c0_i32_1 : i32, i32, i32, i32
  }
  func.func @transform_2(%arg0: i32) -> (i32, i32, i32, i32) {
    %c0_i32 = arith.constant 0 : i32
    %c0_i32_0 = arith.constant 0 : i32
    %c0_i32_1 = arith.constant 0 : i32
    %c0_i32_2 = arith.constant 0 : i32
    return %arg0, %c0_i32, %c0_i32_0, %c0_i32_1 : i32, i32, i32, i32
  }
  func.func @transform_3(%arg0: i32) -> (i32, i32, i32) {
    %c0_i32 = arith.constant 0 : i32
    %c0_i32_0 = arith.constant 0 : i32
    %c0_i32_1 = arith.constant 0 : i32
    return %arg0, %c0_i32, %c0_i32_0 : i32, i32, i32
  }
  func.func @transform_4(%arg0: i32) -> (i32, i32, i32) {
    %c0_i32 = arith.constant 0 : i32
    %c0_i32_0 = arith.constant 0 : i32
    %c0_i32_1 = arith.constant 0 : i32
    return %arg0, %c0_i32, %c0_i32_0 : i32, i32, i32
  }
}

</mosaic_0001>

<llo_original>
// kernel: tpu_custom_call.1
$region0: #{tpu_custom_call.1}
  #allocation0 [shape = 'u32[]', space=smem, size = 0x4, offset = 0x4, fixed_abs, tag = 'smem constant byte address 0x4 - core index']
  #allocation1 [shape = 'u32[144,128]{1,0:T(1,128)}', space=vmem, size = 0x12000, scoped, tag = 'internal scratch']
  #allocation2 [shape = 'f32[16,256]{1,0:T(8,128)}', space=vmem, size = 0x4000, scoped, tag = 'scratch operand']
  %s0 = inlined_call_operand.hbm [shape: f32[2,16,128], index: 0, kind: input, shape index: {}]
  %s1 = inlined_call_operand.vmem [shape: f32[2,6,16,32], index: 1, kind: input, shape index: {}]
  %s2 = inlined_call_operand.vmem [shape: f32[2,6,16,1], index: 2, kind: input, shape index: {}]
  %s3 = inlined_call_operand.vmem [shape: s32[2,1,128], index: 3, kind: input, shape index: {}]
  %s4 = inlined_call_operand.hbm [shape: f32[2,16,128], index: 4, kind: output, shape index: {}]
  %s5 = sld [smem:[#allocation0]]
  $region53: #{tpu_custom_call.1} parent=0
    _
  %s7 = ssub.s32 1, %s5
  %s8 = scalar_select 0, %s7, %s5
  $region1: #{tpu_custom_call.1} parent=0
    #allocation3 [shape = 'u8[16384]{0}', space=vmem, size = 0x4000, scoped, tag = 'input window, operand 0']
    #allocation4 [shape = 's32[2]{0}', space=sflag, size = 0x8, scoped, tag = 'scoped memory for tpu_custom_call.1']
    #allocation5 [shape = 's32[2]{0}', space=sflag, size = 0x8, scoped, tag = 'scoped memory for tpu_custom_call.1']
    #allocation6 [shape = 'u8[16384]{0}', space=vmem, size = 0x4000, scoped, tag = 'output window, operand 0']
    %9 = vsyncpa [#allocation4], 0
    %s10 = scalar_lea.sflag [#allocation4], 1
    %11 = vsyncpa %s10, 0
    %12 = vsyncpa [#allocation5], 0
    %s13 = scalar_lea.sflag [#allocation5], 1
    %14 = vsyncpa %s13, 0
    loop: start=0, step=1, limit=4
    $region2: #{tpu_custom_call.1} parent=1 // loop_pre_header
      _
    $region3: #{tpu_custom_call.1} parent=1 // loop_header
      %s16 = sphi 0, %s20
      %p17 = scmp.ge.s32.totalorder %s16, 4
      %s26 = sphi 0, %s28
      %s29 = sphi 0, %s26
      %s30 = sphi 0, %s29
      %s46 = sphi 0, %s30
      %s52 = sphi 0, %s54
      %s55 = sphi 0, %s52
      %s56 = sphi 0, %s55
      %s72 = sphi 0, %s56
      %s78 = sphi 0, %s80
      %s81 = sphi 0, %s78
      %s82 = sphi 0, %s81
      %s98 = sphi 0, %s82
      %s104 = sphi 0, %s106
      %s107 = sphi 0, %s104
      %s108 = sphi 0, %s107
      %s124 = sphi 0, %s108
      %s130 = sphi 0, %s132
      %s133 = sphi 0, %s130
      %s134 = sphi 0, %s133
      %s150 = sphi 0, %s134
    $region4: #{tpu_custom_call.1} parent=1 // loop_header_branch
      %19 = sbr.rel (%p17) target = $region8
    $region5: #{tpu_custom_call.1} parent=1 // loop_body
      %s21 = ssub.s32 %s16, 1
      %s22 = ssub.s32 %s16, 2
      %s23 = sadd.s32 %s16, 1
      %s24 = ssub.s32 %s16, %s23
      %p25 = scmp.eq.s32.totalorder %s24, 0
      %s27 = sadd.s32 %s26, 1
      %s28 = scalar_select %p25, %s26, %s27
      %p31 = pneg %p25
      %p32 = scmp.eq.s32.totalorder %s16, 1
      %p33 = por %p31, %p32
      %p34 = scmp.ne.s32.totalorder %s26, %s29
      %p35 = scmp.eq.s32.totalorder %s16, 0
      %p36 = por %p34, %p35
      %p37 = scmp.ne.s32.totalorder %s26, %s29
      %p38 = scmp.eq.s32.totalorder %s21, 1
      %p39 = por %p37, %p38
      %p40 = scmp.ne.s32.totalorder %s29, %s30
      %p41 = scmp.eq.s32.totalorder %s21, 0
      %p42 = por %p40, %p41
      %p43 = scmp.ne.s32.totalorder %s29, %s30
      %p44 = scmp.eq.s32.totalorder %s22, 1
      %p45 = por %p43, %p44
      %p47 = scmp.ne.s32.totalorder %s30, %s46
      %p48 = scmp.eq.s32.totalorder %s22, 0
      %p49 = por %p47, %p48
      %s50 = ssub.s32 %s16, %s23
      %p51 = scmp.eq.s32.totalorder %s50, 0
      %s53 = sadd.s32 %s52, 1
      %s54 = scalar_select %p51, %s52, %s53
      %p57 = pneg %p51
      %p58 = scmp.eq.s32.totalorder %s16, 1
      %p59 = por %p57, %p58
      %p60 = scmp.ne.s32.totalorder %s52, %s55
      %p61 = scmp.eq.s32.totalorder %s16, 0
      %p62 = por %p60, %p61
      %p63 = scmp.ne.s32.totalorder %s52, %s55
      %p64 = scmp.eq.s32.totalorder %s21, 1
      %p65 = por %p63, %p64
      %p66 = scmp.ne.s32.totalorder %s55, %s56
      %p67 = scmp.eq.s32.totalorder %s21, 0
      %p68 = por %p66, %p67
      %p69 = scmp.ne.s32.totalorder %s55, %s56
      %p70 = scmp.eq.s32.totalorder %s22, 1
      %p71 = por %p69, %p70
      %p73 = scmp.ne.s32.totalorder %s56, %s72
      %p74 = scmp.eq.s32.totalorder %s22, 0
      %p75 = por %p73, %p74
      %s76 = ssub.s32 %s16, %s23
      %p77 = scmp.eq.s32.totalorder %s76, 0
      %s79 = sadd.s32 %s78, 1
      %s80 = scalar_select %p77, %s78, %s79
      %p83 = pneg %p77
      %p84 = scmp.eq.s32.totalorder %s16, 1
      %p85 = por %p83, %p84
      %p86 = scmp.ne.s32.totalorder %s78, %s81
      %p87 = scmp.eq.s32.totalorder %s16, 0
      %p88 = por %p86, %p87
      %p89 = scmp.ne.s32.totalorder %s78, %s81
      %p90 = scmp.eq.s32.totalorder %s21, 1
      %p91 = por %p89, %p90
      %p92 = scmp.ne.s32.totalorder %s81, %s82
      %p93 = scmp.eq.s32.totalorder %s21, 0
      %p94 = por %p92, %p93
      %p95 = scmp.ne.s32.totalorder %s81, %s82
      %p96 = scmp.eq.s32.totalorder %s22, 1
      %p97 = por %p95, %p96
      %p99 = scmp.ne.s32.totalorder %s82, %s98
      %p100 = scmp.eq.s32.totalorder %s22, 0
      %p101 = por %p99, %p100
      %s102 = ssub.s32 %s16, %s23
      %p103 = scmp.eq.s32.totalorder %s102, 0
      %s105 = sadd.s32 %s104, 1
      %s106 = scalar_select %p103, %s104, %s105
      %p109 = pneg %p103
      %p110 = scmp.eq.s32.totalorder %s16, 1
      %p111 = por %p109, %p110
      %p112 = scmp.ne.s32.totalorder %s104, %s107
      %p113 = scmp.eq.s32.totalorder %s16, 0
      %p114 = por %p112, %p113
      %p115 = scmp.ne.s32.totalorder %s104, %s107
      %p116 = scmp.eq.s32.totalorder %s21, 1
      %p117 = por %p115, %p116
      %p118 = scmp.ne.s32.totalorder %s107, %s108
      %p119 = scmp.eq.s32.totalorder %s21, 0
      %p120 = por %p118, %p119
      %p121 = scmp.ne.s32.totalorder %s107, %s108
      %p122 = scmp.eq.s32.totalorder %s22, 1
      %p123 = por %p121, %p122
      %p125 = scmp.ne.s32.totalorder %s108, %s124
      %p126 = scmp.eq.s32.totalorder %s22, 0
      %p127 = por %p125, %p126
      %s128 = ssub.s32 %s16, %s23
      %p129 = scmp.eq.s32.totalorder %s128, 0
      %s131 = sadd.s32 %s130, 1
      %s132 = scalar_select %p129, %s130, %s131
      %p135 = pneg %p129
      %p136 = scmp.eq.s32.totalorder %s16, 1
      %p137 = por %p135, %p136
      %p138 = scmp.ne.s32.totalorder %s130, %s133
      %p139 = scmp.eq.s32.totalorder %s16, 0
      %p140 = por %p138, %p139
      %p141 = scmp.ne.s32.totalorder %s130, %s133
      %p142 = scmp.eq.s32.totalorder %s21, 1
      %p143 = por %p141, %p142
      %p144 = scmp.ne.s32.totalorder %s133, %s134
      %p145 = scmp.eq.s32.totalorder %s21, 0
      %p146 = por %p144, %p145
      %p147 = scmp.ne.s32.totalorder %s133, %s134
      %p148 = scmp.eq.s32.totalorder %s22, 1
      %p149 = por %p147, %p148
      %p151 = scmp.ne.s32.totalorder %s134, %s150
      %p152 = scmp.eq.s32.totalorder %s22, 0
      %p153 = por %p151, %p152
      %p154 = scmp.le.s32.totalorder 1, %s16
      %p155 = scmp.lt.s32.totalorder %s16, 3
      %p156 = pnand %p154, %p155
      %p157 = pneg %p156
      // Predicated region
      $region9: #{tpu_custom_call.1} parent=5 // pred_check
        _
      $region10: #{tpu_custom_call.1} parent=5 // pred_check_branch
        %159 = sbr.rel (%p156) target = $region12
      $region11: #{tpu_custom_call.1} parent=5 // pred_region
        %s160 = ssub.s32 %s16, 1
      $region12: #{tpu_custom_call.1} parent=5 // pred_fallthru
        _
      %p161 = scmp.lt.s32.totalorder %s16, 2
      // Predicated region
      $region13: #{tpu_custom_call.1} parent=5 // pred_check
        %p162 = pneg %p161
      $region14: #{tpu_custom_call.1} parent=5 // pred_check_branch
        %164 = sbr.rel (%p162) target = $region16
      $region15: #{tpu_custom_call.1} parent=5 // pred_region
        // Predicated region
        $region17: #{tpu_custom_call.1} parent=15 // pred_check
          %p165 = pneg %p36
        $region18: #{tpu_custom_call.1} parent=15 // pred_check_branch
          %167 = sbr.rel (%p165) target = $region20
        $region19: #{tpu_custom_call.1} parent=15 // pred_region
          %s168 = sand.u32 %s26, 1
          %s169 = scalar_lea.sflag [#allocation4], %s168
          %s170 = sand.u32 %s26, 1
          %s171 = smul.addr %s170, 16
          %s172 = scalar_lea.vmem [#allocation3], %s171
          %s174 = ssub.s32 256, 256
          %175 = vsyncadd %s169, %s174
          %s176 = smul.addr %s16, 2
          %s177 = smul.addr %s176, 128
          %s178 = scalar_lea.hbm %s0, %s177
          %s179 = sshll.u32 %s172, 4
          %s180 = int_to_ptr.vmem [resolvable:$true] %s179
          %185 = dma.hbm_to_vmem [thread:$0]  %s178, 256, %s180, %s169, 128, 128, 8
        $region20: #{tpu_custom_call.1} parent=15 // pred_fallthru
          _
        // Predicated region
        $region21: #{tpu_custom_call.1} parent=15 // pred_check
          %p186 = pneg %p62
        $region22: #{tpu_custom_call.1} parent=15 // pred_check_branch
          %188 = sbr.rel (%p186) target = $region24
        $region23: #{tpu_custom_call.1} parent=15 // pred_region
          %p189 = scmp.lt.s32.totalorder %s16, 1
          %s190 = scalar_select %p189, %s16, 1
          %s191 = smul.addr %s190, 12
          %s192 = smul.addr %s191, 8
          %s193 = scalar_lea.vmem %s1, %s192
        $region24: #{tpu_custom_call.1} parent=15 // pred_fallthru
          _
        // Predicated region
        $region25: #{tpu_custom_call.1} parent=15 // pred_check
          %p194 = pneg %p88
        $region26: #{tpu_custom_call.1} parent=15 // pred_check_branch
          %196 = sbr.rel (%p194) target = $region28
        $region27: #{tpu_custom_call.1} parent=15 // pred_region
          %p197 = scmp.lt.s32.totalorder %s16, 1
          %s198 = scalar_select %p197, %s16, 1
          %s199 = smul.addr %s198, 12
          %s200 = smul.addr %s199, 8
          %s201 = scalar_lea.vmem %s2, %s200
        $region28: #{tpu_custom_call.1} parent=15 // pred_fallthru
          _
        // Predicated region
        $region29: #{tpu_custom_call.1} parent=15 // pred_check
          %p202 = pneg %p114
        $region30: #{tpu_custom_call.1} parent=15 // pred_check_branch
          %204 = sbr.rel (%p202) target = $region32
        $region31: #{tpu_custom_call.1} parent=15 // pred_region
          %p205 = scmp.lt.s32.totalorder %s16, 1
          %s206 = scalar_select %p205, %s16, 1
          %s207 = scalar_lea.vmem %s3, %s206
        $region32: #{tpu_custom_call.1} parent=15 // pred_fallthru
          _
      $region16: #{tpu_custom_call.1} parent=5 // pred_fallthru
        _
      %p208 = scmp.le.s32.totalorder 1, %s16
      %p209 = scmp.lt.s32.totalorder %s16, 3
      %p210 = pnand %p208, %p209
      %p211 = pneg %p210
      // Predicated region
      $region33: #{tpu_custom_call.1} parent=5 // pred_check
        _
      $region34: #{tpu_custom_call.1} parent=5 // pred_check_branch
        %213 = sbr.rel (%p210) target = $region36
      $region35: #{tpu_custom_call.1} parent=5 // pred_region
        %s214 = ssub.s32 %s16, 1
        %s215 = sand.u32 %s29, 1
        %s216 = scalar_lea.sflag [#allocation4], %s215
        %s217 = sand.u32 %s29, 1
        %s218 = smul.addr %s217, 16
        %s219 = scalar_lea.vmem [#allocation3], %s218
        // Predicated region
        $region37: #{tpu_custom_call.1} parent=35 // pred_check
          %p220 = pneg %p42
        $region38: #{tpu_custom_call.1} parent=35 // pred_check_branch
          %222 = sbr.rel (%p220) target = $region40
        $region39: #{tpu_custom_call.1} parent=35 // pred_region
          %223 = dma.done %s216, 256
        $region40: #{tpu_custom_call.1} parent=35 // pred_fallthru
          _
        %s224 = sand.u32 %s29, 1
        %s225 = scalar_lea.sflag [#allocation4], %s224
        %s226 = sand.u32 %s29, 1
        %s227 = smul.addr %s226, 16
        %s228 = scalar_lea.vmem [#allocation3], %s227
        %p229 = pneg %p42
        %p230 = pneg %p39
        %p231 = scmp.lt.s32.totalorder %s21, 1
        %s232 = scalar_select %p231, %s21, 1
        %s233 = smul.addr %s232, 12
        %s234 = smul.addr %s233, 8
        %s235 = scalar_lea.vmem %s1, %s234
        %p236 = pneg %p68
        %p237 = pneg %p65
        %p238 = scmp.lt.s32.totalorder %s21, 1
        %s239 = scalar_select %p238, %s21, 1
        %s240 = smul.addr %s239, 12
        %s241 = smul.addr %s240, 8
        %s242 = scalar_lea.vmem %s2, %s241
        %p243 = pneg %p94
        %p244 = pneg %p91
        %p245 = scmp.lt.s32.totalorder %s21, 1
        %s246 = scalar_select %p245, %s21, 1
        %s247 = scalar_lea.vmem %s3, %s246
        %p248 = pneg %p120
        %p249 = pneg %p117
        %p250 = pneg %p146
        %p251 = pneg %p143
        %s252 = sand.u32 %s133, 1
        %s253 = scalar_lea.sflag [#allocation5], %s252
        %s254 = sand.u32 %s133, 1
        %s255 = smul.addr %s254, 16
        %s256 = scalar_lea.vmem [#allocation6], %s255
        %p257 = scmp.lt.s32.totalorder %s21, 1
        %s258 = scalar_select %p257, %s21, 1
        %s259 = smul.addr %s258, 12
        %s260 = smul.addr %s259, 8
        %s261 = scalar_lea.vmem %s1, %s260
        %p262 = scmp.lt.s32.totalorder %s21, 1
        %s263 = scalar_select %p262, %s21, 1
        %s264 = smul.addr %s263, 12
        %s265 = smul.addr %s264, 8
        %s266 = scalar_lea.vmem %s2, %s265
        %p267 = scmp.lt.s32.totalorder %s21, 1
        %s268 = scalar_select %p267, %s21, 1
        %s269 = scalar_lea.vmem %s3, %s268
        %270 = vst [vmem:[#allocation2] sm:$0xff] 0.0
        %271 = vst [vmem:[#allocation2 + $0x10] sm:$0xff] 0.0
        %v272 = vld [vmem:[%s269] sm:$0x1]
        %v273 = vld [vmem:[%s219] sm:$0xff]
        %v274 = vld [vmem:[%s219 + $0x8] sm:$0xff]
        %vm275 = vcmp.ge.s32.totalorder %v272, 1
        %v276 = vsel %vm275, 1, 0
        %v277 = vcvt.s32.f32 %v276
        %278 = vst [vmem:[#allocation2 + $0x8] sm:$0xff] %v273
        %279 = vst [vmem:[#allocation2 + $0x18] sm:$0xff] %v274
        %v280 = vld [vmem:[#allocation2] sm:$0xff]
        %v281 = vld [vmem:[#allocation2 + $0x8] sm:$0xff]
        %v282 = vld [vmem:[#allocation2 + $0x10] sm:$0xff]
        %v283 = vld [vmem:[#allocation2 + $0x18] sm:$0xff]
        %v285 = vlaneseq
        %v286 = vshrl.u32 %v285, 7
        %v287 = vsub.s32 0, %v286
        %v288 = vrot.slane %v277, %v287
        %289 = vrot.lane.b32.xlu0 %v288, 127
        %v290 = vpop.permute.xlu0 %289
        %v292 = vmul.f32 %v280, %v290
        %v293 = vmul.f32 %v281, %v290
        %v294 = vmul.f32 %v282, %v290
        %v295 = vmul.f32 %v283, %v290
        %298 = vrot.lane.b32.xlu0 %v273, 127
        %v299 = vpop.permute.xlu0 %298
        %300 = vrot.lane.b32.xlu0 %v274, 127
        %v301 = vpop.permute.xlu0 %300
        %v302 = vld [vmem:[%s261] sm:$0xff]
        %v303 = vld [vmem:[%s261 + $0x8] sm:$0xff]
        %v304 = vld [vmem:[%s266] sm:$0xff]
        %v305 = vld [vmem:[%s266 + $0x8] sm:$0xff]
        %307 = vset.pattern.permute.xlu0 0
        %308 = vperm.xlu0 %307, %v304
        %v309 = vpop.permute.xlu0 %308
        %312 = vset.pattern.permute.xlu0 0
        %313 = vperm.xlu0 %312, %v305
        %v314 = vpop.permute.xlu0 %313
        %320 = vrot.lane.b32.xlu0 %v292, 1
        %v321 = vpop.permute.xlu0 %320
        %322 = vrot.lane.b32.xlu0 %v293, 1
        %v323 = vpop.permute.xlu0 %322
        %324 = vrot.lane.b32.xlu0 %v294, 1
        %v325 = vpop.permute.xlu0 %324
        %326 = vrot.lane.b32.xlu0 %v295, 1
        %v327 = vpop.permute.xlu0 %326
        %328 = vrot.lane.b32.xlu0 %v299, 1
        %v329 = vpop.permute.xlu0 %328
        %330 = vrot.lane.b32.xlu0 %v301, 1
        %v331 = vpop.permute.xlu0 %330
        %vm332 = vcmask 7168
        %v333 = vsel %vm332, %v321, %v323
        %v334 = vsel %vm332, %v325, %v327
        %vm339 = vcmask 261120
        %v341 = vsel %vm339, %v302, 0
        %v344 = vsel %vm339, %v303, 0
        %346 = vmatprep.subr.mxu0 0.0
        %347 = vmatpush1.msra.mxu0 %v333
        %348 = vmatprep.subr.mxu0 0.0
        %349 = vmatpush1.msra.mxu0 %v334
        %350 = vmatprep.subr.mxu0 0.0
        %351 = vmatpush1.msra.mxu0 %v329
        %352 = vmatprep.subr.mxu0 0.0
        %353 = vmatpush1.msra.mxu0 %v331
        %354 = vmatprep.subr.mxu0 0.0
        %355 = vmatpush1.msra.mxu0 0.0
        %356 = vmatprep.subr.mxu0 0.0
        %357 = vmatpush1.msra.mxu0 0.0
        %358 = vmatprep.subr.mxu0 0.0
        %359 = vmatpush1.msra.mxu0 0.0
        %360 = vmatprep.subr.mxu0 0.0
        %361 = vmatpush1.msra.mxu0 0.0
        %362 = vmatprep.subr.mxu0 0.0
        %363 = vmatpush1.msra.mxu0 0.0
        %364 = vmatprep.subr.mxu0 0.0
        %365 = vmatpush1.msra.mxu0 0.0
        %366 = vmatprep.subr.mxu0 0.0
        %367 = vmatpush1.msra.mxu0 0.0
        %368 = vmatprep.subr.mxu0 0.0
        %369 = vmatpush1.msra.mxu0 0.0
        %370 = vmatprep.subr.mxu0 0.0
        %371 = vmatpush1.msra.mxu0 0.0
        %372 = vmatprep.subr.mxu0 0.0
        %373 = vmatpush1.msra.mxu0 0.0
        %374 = vmatprep.subr.mxu0 0.0
        %375 = vmatpush1.msra.mxu0 0.0
        %376 = vmatprep.subr.mxu0 0.0
        %377 = vmatpush1.msra.mxu0 0.0
        %378 = vmatprep.subr.mxu0 0.0
        %379 = vmatpush1.msra.mxu0 0.0
        %380 = vmatprep.subr.mxu0 0.0
        %381 = vmatpush1.msra.mxu0 0.0
        %382 = vmatprep.subr.mxu0 0.0
        %383 = vmatpush1.msra.mxu0 0.0
        %384 = vmatprep.subr.mxu0 0.0
        %385 = vmatpush1.msra.mxu0 0.0
        %386 = vmatprep.subr.mxu0 0.0
        %387 = vmatpush1.msra.mxu0 0.0
        %388 = vmatprep.subr.mxu0 0.0
        %389 = vmatpush1.msra.mxu0 0.0
        %390 = vmatprep.subr.mxu0 0.0
        %391 = vmatpush1.msra.mxu0 0.0
        %392 = vmatprep.subr.mxu0 0.0
        %393 = vmatpush1.msra.mxu0 0.0
        %394 = vmatprep.subr.mxu0 0.0
        %395 = vmatpush1.msra.mxu0 0.0
        %396 = vmatprep.subr.mxu0 0.0
        %397 = vmatpush1.msra.mxu0 0.0
        %398 = vmatprep.subr.mxu0 0.0
        %399 = vmatpush1.msra.mxu0 0.0
        %400 = vmatprep.subr.mxu0 0.0
        %401 = vmatpush1.msra.mxu0 0.0
        %402 = vmatprep.subr.mxu0 0.0
        %403 = vmatpush1.msra.mxu0 0.0
        %404 = vmatprep.subr.mxu0 0.0
        %405 = vmatpush1.msra.mxu0 0.0
        %406 = vmatprep.subr.mxu0 0.0
        %407 = vmatpush1.msra.mxu0 0.0
        %408 = vmatprep.subr.mxu0 0.0
        %409 = vmatpush1.msra.mxu0 0.0
        %410 = vmatprep.mubr.f32.mxu0 0.0
        %411 = vmatmul.mubr.f32.gmra.mrb[0].mxu0 %v341
        %v412 = vpop.f32.mrb[0].mxu0
        %v413 = vadd.f32 %v309, %v412
        %v414 = vpop.f32.mrb[0].mxu0
        %415 = vmatprep.mubr.f32.mxu0 0.0
        %416 = vmatmul.mubr.f32.gmra.mrb[0].mxu0 %v344
        %v417 = vpop.f32.mrb[0].mxu0
        %v418 = vadd.f32 %v314, %v417
        %v419 = vpop.f32.mrb[0].mxu0
        %420 = vdwg.mxu0
        %v421 = vmax.f32 %v413, 0.0
        %v422 = vmax.f32 %v418, 0.0
        %423 = vst [vmem:[#allocation2 + $0x8] sm:$0xff] %v421
        %424 = vst [vmem:[#allocation2 + $0x18] sm:$0xff] %v422
        %v425 = vld [vmem:[#allocation2] sm:$0xff]
        %v426 = vld [vmem:[#allocation2 + $0x8] sm:$0xff]
        %v427 = vld [vmem:[#allocation2 + $0x10] sm:$0xff]
        %v428 = vld [vmem:[#allocation2 + $0x18] sm:$0xff]
        %v429 = vmul.f32 %v425, %v290
        %v430 = vmul.f32 %v426, %v290
        %v431 = vmul.f32 %v427, %v290
        %v432 = vmul.f32 %v428, %v290
        %435 = vrot.lane.b32.xlu0 %v421, 127
        %v436 = vpop.permute.xlu0 %435
        %437 = vrot.lane.b32.xlu0 %v422, 127
        %v438 = vpop.permute.xlu0 %437
        %s439 = scalar_lea.vmem %s261, 16
        %v440 = vld [vmem:[%s439] sm:$0xff]
        %v441 = vld [vmem:[%s439 + $0x8] sm:$0xff]
        %s442 = scalar_lea.vmem %s266, 16
        %v443 = vld [vmem:[%s442] sm:$0xff]
        %v444 = vld [vmem:[%s442 + $0x8] sm:$0xff]
        %446 = vset.pattern.permute.xlu0 0
        %447 = vperm.xlu0 %446, %v443
        %v448 = vpop.permute.xlu0 %447
        %451 = vset.pattern.permute.xlu0 0
        %452 = vperm.xlu0 %451, %v444
        %v453 = vpop.permute.xlu0 %452
        %459 = vrot.lane.b32.xlu0 %v429, 1
        %v460 = vpop.permute.xlu0 %459
        %461 = vrot.lane.b32.xlu0 %v430, 1
        %v462 = vpop.permute.xlu0 %461
        %463 = vrot.lane.b32.xlu0 %v431, 1
        %v464 = vpop.permute.xlu0 %463
        %465 = vrot.lane.b32.xlu0 %v432, 1
        %v466 = vpop.permute.xlu0 %465
        %467 = vrot.lane.b32.xlu0 %v436, 1
        %v468 = vpop.permute.xlu0 %467
        %469 = vrot.lane.b32.xlu0 %v438, 1
        %v470 = vpop.permute.xlu0 %469
        %v471 = vsel %vm332, %v460, %v462
        %v472 = vsel %vm332, %v464, %v466
        %v478 = vsel %vm339, %v440, 0
        %v481 = vsel %vm339, %v441, 0
        %483 = vmatprep.subr.mxu0 0.0
        %484 = vmatpush1.msra.mxu0 %v471
        %485 = vmatprep.subr.mxu0 0.0
        %486 = vmatpush1.msra.mxu0 %v472
        %487 = vmatprep.subr.mxu0 0.0
        %488 = vmatpush1.msra.mxu0 %v468
        %489 = vmatprep.subr.mxu0 0.0
        %490 = vmatpush1.msra.mxu0 %v470
        %491 = vmatprep.subr.mxu0 0.0
        %492 = vmatpush1.msra.mxu0 0.0
        %493 = vmatprep.subr.mxu0 0.0
        %494 = vmatpush1.msra.mxu0 0.0
        %495 = vmatprep.subr.mxu0 0.0
        %496 = vmatpush1.msra.mxu0 0.0
        %497 = vmatprep.subr.mxu0 0.0
        %498 = vmatpush1.msra.mxu0 0.0
        %499 = vmatprep.subr.mxu0 0.0
        %500 = vmatpush1.msra.mxu0 0.0
        %501 = vmatprep.subr.mxu0 0.0
        %502 = vmatpush1.msra.mxu0 0.0
        %503 = vmatprep.subr.mxu0 0.0
        %504 = vmatpush1.msra.mxu0 0.0
        %505 = vmatprep.subr.mxu0 0.0
        %506 = vmatpush1.msra.mxu0 0.0
        %507 = vmatprep.subr.mxu0 0.0
        %508 = vmatpush1.msra.mxu0 0.0
        %509 = vmatprep.subr.mxu0 0.0
        %510 = vmatpush1.msra.mxu0 0.0
        %511 = vmatprep.subr.mxu0 0.0
        %512 = vmatpush1.msra.mxu0 0.0
        %513 = vmatprep.subr.mxu0 0.0
        %514 = vmatpush1.msra.mxu0 0.0
        %515 = vmatprep.subr.mxu0 0.0
        %516 = vmatpush1.msra.mxu0 0.0
        %517 = vmatprep.subr.mxu0 0.0
        %518 = vmatpush1.msra.mxu0 0.0
        %519 = vmatprep.subr.mxu0 0.0
        %520 = vmatpush1.msra.mxu0 0.0
        %521 = vmatprep.subr.mxu0 0.0
        %522 = vmatpush1.msra.mxu0 0.0
        %523 = vmatprep.subr.mxu0 0.0
        %524 = vmatpush1.msra.mxu0 0.0
        %525 = vmatprep.subr.mxu0 0.0
        %526 = vmatpush1.msra.mxu0 0.0
        %527 = vmatprep.subr.mxu0 0.0
        %528 = vmatpush1.msra.mxu0 0.0
        %529 = vmatprep.subr.mxu0 0.0
        %530 = vmatpush1.msra.mxu0 0.0
        %531 = vmatprep.subr.mxu0 0.0
        %532 = vmatpush1.msra.mxu0 0.0
        %533 = vmatprep.subr.mxu0 0.0
        %534 = vmatpush1.msra.mxu0 0.0
        %535 = vmatprep.subr.mxu0 0.0
        %536 = vmatpush1.msra.mxu0 0.0
        %537 = vmatprep.subr.mxu0 0.0
        %538 = vmatpush1.msra.mxu0 0.0
        %539 = vmatprep.subr.mxu0 0.0
        %540 = vmatpush1.msra.mxu0 0.0
        %541 = vmatprep.subr.mxu0 0.0
        %542 = vmatpush1.msra.mxu0 0.0
        %543 = vmatprep.subr.mxu0 0.0
        %544 = vmatpush1.msra.mxu0 0.0
        %545 = vmatprep.subr.mxu0 0.0
        %546 = vmatpush1.msra.mxu0 0.0
        %547 = vmatprep.mubr.f32.mxu0 0.0
        %548 = vmatmul.mubr.f32.gmra.mrb[0].mxu0 %v478
        %v549 = vpop.f32.mrb[0].mxu0
        %v550 = vadd.f32 %v448, %v549
        %v551 = vpop.f32.mrb[0].mxu0
        %552 = vmatprep.mubr.f32.mxu0 0.0
        %553 = vmatmul.mubr.f32.gmra.mrb[0].mxu0 %v481
        %v554 = vpop.f32.mrb[0].mxu0
        %v555 = vadd.f32 %v453, %v554
        %v556 = vpop.f32.mrb[0].mxu0
        %557 = vdwg.mxu0
        %v558 = vmax.f32 %v550, 0.0
        %v559 = vmax.f32 %v555, 0.0
        %v560 = vadd.f32 %v558, %v273
        %v561 = vadd.f32 %v559, %v274
        %v562 = vmax.f32 %v560, 0.0
        %v563 = vmax.f32 %v561, 0.0
        %vm564 = vcmp.ge.s32.totalorder %v272, 2
        %v565 = vsel %vm564, 1, 0
        %v566 = vcvt.s32.f32 %v565
        %567 = vst [vmem:[#allocation2 + $0x8] sm:$0xff] %v562
        %568 = vst [vmem:[#allocation2 + $0x18] sm:$0xff] %v563
        %v569 = vld [vmem:[#allocation2] sm:$0xff]
        %v570 = vld [vmem:[#allocation2 + $0x8] sm:$0xff]
        %v571 = vld [vmem:[#allocation2 + $0x10] sm:$0xff]
        %v572 = vld [vmem:[#allocation2 + $0x18] sm:$0xff]
        %v574 = vlaneseq
        %v575 = vshrl.u32 %v574, 7
        %v576 = vsub.s32 0, %v575
        %v577 = vrot.slane %v566, %v576
        %578 = vrot.lane.b32.xlu0 %v577, 126
        %v579 = vpop.permute.xlu0 %578
        %v581 = vmul.f32 %v569, %v579
        %v582 = vmul.f32 %v570, %v579
        %v583 = vmul.f32 %v571, %v579
        %v584 = vmul.f32 %v572, %v579
        %587 = vrot.lane.b32.xlu0 %v562, 126
        %v588 = vpop.permute.xlu0 %587
        %589 = vrot.lane.b32.xlu0 %v563, 126
        %v590 = vpop.permute.xlu0 %589
        %s591 = scalar_lea.vmem %s261, 32
        %v592 = vld [vmem:[%s591] sm:$0xff]
        %v593 = vld [vmem:[%s591 + $0x8] sm:$0xff]
        %s594 = scalar_lea.vmem %s266, 32
        %v595 = vld [vmem:[%s594] sm:$0xff]
        %v596 = vld [vmem:[%s594 + $0x8] sm:$0xff]
        %598 = vset.pattern.permute.xlu0 0
        %599 = vperm.xlu0 %598, %v595
        %v600 = vpop.permute.xlu0 %599
        %603 = vset.pattern.permute.xlu0 0
        %604 = vperm.xlu0 %603, %v596
        %v605 = vpop.permute.xlu0 %604
        %611 = vrot.lane.b32.xlu0 %v581, 2
        %v612 = vpop.permute.xlu0 %611
        %613 = vrot.lane.b32.xlu0 %v582, 2
        %v614 = vpop.permute.xlu0 %613
        %615 = vrot.lane.b32.xlu0 %v583, 2
        %v616 = vpop.permute.xlu0 %615
        %617 = vrot.lane.b32.xlu0 %v584, 2
        %v618 = vpop.permute.xlu0 %617
        %619 = vrot.lane.b32.xlu0 %v588, 2
        %v620 = vpop.permute.xlu0 %619
        %621 = vrot.lane.b32.xlu0 %v590, 2
        %v622 = vpop.permute.xlu0 %621
        %vm623 = vcmask 15360
        %v624 = vsel %vm623, %v612, %v614
        %v625 = vsel %vm623, %v616, %v618
        %v631 = vsel %vm339, %v592, 0
        %v634 = vsel %vm339, %v593, 0
        %636 = vmatprep.subr.mxu0 0.0
        %637 = vmatpush1.msra.mxu0 %v624
        %638 = vmatprep.subr.mxu0 0.0
        %639 = vmatpush1.msra.mxu0 %v625
        %640 = vmatprep.subr.mxu0 0.0
        %641 = vmatpush1.msra.mxu0 %v620
        %642 = vmatprep.subr.mxu0 0.0
        %643 = vmatpush1.msra.mxu0 %v622
        %644 = vmatprep.subr.mxu0 0.0
        %645 = vmatpush1.msra.mxu0 0.0
        %646 = vmatprep.subr.mxu0 0.0
        %647 = vmatpush1.msra.mxu0 0.0
        %648 = vmatprep.subr.mxu0 0.0
        %649 = vmatpush1.msra.mxu0 0.0
        %650 = vmatprep.subr.mxu0 0.0
        %651 = vmatpush1.msra.mxu0 0.0
        %652 = vmatprep.subr.mxu0 0.0
        %653 = vmatpush1.msra.mxu0 0.0
        %654 = vmatprep.subr.mxu0 0.0
        %655 = vmatpush1.msra.mxu0 0.0
        %656 = vmatprep.subr.mxu0 0.0
        %657 = vmatpush1.msra.mxu0 0.0
        %658 = vmatprep.subr.mxu0 0.0
        %659 = vmatpush1.msra.mxu0 0.0
        %660 = vmatprep.subr.mxu0 0.0
        %661 = vmatpush1.msra.mxu0 0.0
        %662 = vmatprep.subr.mxu0 0.0
        %663 = vmatpush1.msra.mxu0 0.0
        %664 = vmatprep.subr.mxu0 0.0
        %665 = vmatpush1.msra.mxu0 0.0
        %666 = vmatprep.subr.mxu0 0.0
        %667 = vmatpush1.msra.mxu0 0.0
        %668 = vmatprep.subr.mxu0 0.0
        %669 = vmatpush1.msra.mxu0 0.0
        %670 = vmatprep.subr.mxu0 0.0
        %671 = vmatpush1.msra.mxu0 0.0
        %672 = vmatprep.subr.mxu0 0.0
        %673 = vmatpush1.msra.mxu0 0.0
        %674 = vmatprep.subr.mxu0 0.0
        %675 = vmatpush1.msra.mxu0 0.0
        %676 = vmatprep.subr.mxu0 0.0
        %677 = vmatpush1.msra.mxu0 0.0
        %678 = vmatprep.subr.mxu0 0.0
        %679 = vmatpush1.msra.mxu0 0.0
        %680 = vmatprep.subr.mxu0 0.0
        %681 = vmatpush1.msra.mxu0 0.0
        %682 = vmatprep.subr.mxu0 0.0
        %683 = vmatpush1.msra.mxu0 0.0
        %684 = vmatprep.subr.mxu0 0.0
        %685 = vmatpush1.msra.mxu0 0.0
        %686 = vmatprep.subr.mxu0 0.0
        %687 = vmatpush1.msra.mxu0 0.0
        %688 = vmatprep.subr.mxu0 0.0
        %689 = vmatpush1.msra.mxu0 0.0
        %690 = vmatprep.subr.mxu0 0.0
        %691 = vmatpush1.msra.mxu0 0.0
        %692 = vmatprep.subr.mxu0 0.0
        %693 = vmatpush1.msra.mxu0 0.0
        %694 = vmatprep.subr.mxu0 0.0
        %695 = vmatpush1.msra.mxu0 0.0
        %696 = vmatprep.subr.mxu0 0.0
        %697 = vmatpush1.msra.mxu0 0.0
        %698 = vmatprep.subr.mxu0 0.0
        %699 = vmatpush1.msra.mxu0 0.0
        %700 = vmatprep.mubr.f32.mxu0 0.0
        %701 = vmatmul.mubr.f32.gmra.mrb[0].mxu0 %v631
        %v702 = vpop.f32.mrb[0].mxu0
        %v703 = vadd.f32 %v600, %v702
        %v704 = vpop.f32.mrb[0].mxu0
        %705 = vmatprep.mubr.f32.mxu0 0.0
        %706 = vmatmul.mubr.f32.gmra.mrb[0].mxu0 %v634
        %v707 = vpop.f32.mrb[0].mxu0
        %v708 = vadd.f32 %v605, %v707
        %v709 = vpop.f32.mrb[0].mxu0
        %710 = vdwg.mxu0
        %v711 = vmax.f32 %v703, 0.0
        %v712 = vmax.f32 %v708, 0.0
        %713 = vst [vmem:[#allocation2 + $0x8] sm:$0xff] %v711
        %714 = vst [vmem:[#allocation2 + $0x18] sm:$0xff] %v712
        %v715 = vld [vmem:[#allocation2] sm:$0xff]
        %v716 = vld [vmem:[#allocation2 + $0x8] sm:$0xff]
        %v717 = vld [vmem:[#allocation2 + $0x10] sm:$0xff]
        %v718 = vld [vmem:[#allocation2 + $0x18] sm:$0xff]
        %v719 = vmul.f32 %v715, %v579
        %v720 = vmul.f32 %v716, %v579
        %v721 = vmul.f32 %v717, %v579
        %v722 = vmul.f32 %v718, %v579
        %725 = vrot.lane.b32.xlu0 %v711, 126
        %v726 = vpop.permute.xlu0 %725
        %727 = vrot.lane.b32.xlu0 %v712, 126
        %v728 = vpop.permute.xlu0 %727
        %s729 = scalar_lea.vmem %s261, 48
        %v730 = vld [vmem:[%s729] sm:$0xff]
        %v731 = vld [vmem:[%s729 + $0x8] sm:$0xff]
        %s732 = scalar_lea.vmem %s266, 48
        %v733 = vld [vmem:[%s732] sm:$0xff]
        %v734 = vld [vmem:[%s732 + $0x8] sm:$0xff]
        %736 = vset.pattern.permute.xlu0 0
        %737 = vperm.xlu0 %736, %v733
        %v738 = vpop.permute.xlu0 %737
        %741 = vset.pattern.permute.xlu0 0
        %742 = vperm.xlu0 %741, %v734
        %v743 = vpop.permute.xlu0 %742
        %749 = vrot.lane.b32.xlu0 %v719, 2
        %v750 = vpop.permute.xlu0 %749
        %751 = vrot.lane.b32.xlu0 %v720, 2
        %v752 = vpop.permute.xlu0 %751
        %753 = vrot.lane.b32.xlu0 %v721, 2
        %v754 = vpop.permute.xlu0 %753
        %755 = vrot.lane.b32.xlu0 %v722, 2
        %v756 = vpop.permute.xlu0 %755
        %757 = vrot.lane.b32.xlu0 %v726, 2
        %v758 = vpop.permute.xlu0 %757
        %759 = vrot.lane.b32.xlu0 %v728, 2
        %v760 = vpop.permute.xlu0 %759
        %v761 = vsel %vm623, %v750, %v752
        %v762 = vsel %vm623, %v754, %v756
        %v768 = vsel %vm339, %v730, 0
        %v771 = vsel %vm339, %v731, 0
        %773 = vmatprep.subr.mxu0 0.0
        %774 = vmatpush1.msra.mxu0 %v761
        %775 = vmatprep.subr.mxu0 0.0
        %776 = vmatpush1.msra.mxu0 %v762
        %777 = vmatprep.subr.mxu0 0.0
        %778 = vmatpush1.msra.mxu0 %v758
        %779 = vmatprep.subr.mxu0 0.0
        %780 = vmatpush1.msra.mxu0 %v760
        %781 = vmatprep.subr.mxu0 0.0
        %782 = vmatpush1.msra.mxu0 0.0
        %783 = vmatprep.subr.mxu0 0.0
        %784 = vmatpush1.msra.mxu0 0.0
        %785 = vmatprep.subr.mxu0 0.0
        %786 = vmatpush1.msra.mxu0 0.0
        %787 = vmatprep.subr.mxu0 0.0
        %788 = vmatpush1.msra.mxu0 0.0
        %789 = vmatprep.subr.mxu0 0.0
        %790 = vmatpush1.msra.mxu0 0.0
        %791 = vmatprep.subr.mxu0 0.0
        %792 = vmatpush1.msra.mxu0 0.0
        %793 = vmatprep.subr.mxu0 0.0
        %794 = vmatpush1.msra.mxu0 0.0
        %795 = vmatprep.subr.mxu0 0.0
        %796 = vmatpush1.msra.mxu0 0.0
        %797 = vmatprep.subr.mxu0 0.0
        %798 = vmatpush1.msra.mxu0 0.0
        %799 = vmatprep.subr.mxu0 0.0
        %800 = vmatpush1.msra.mxu0 0.0
        %801 = vmatprep.subr.mxu0 0.0
        %802 = vmatpush1.msra.mxu0 0.0
        %803 = vmatprep.subr.mxu0 0.0
        %804 = vmatpush1.msra.mxu0 0.0
        %805 = vmatprep.subr.mxu0 0.0
        %806 = vmatpush1.msra.mxu0 0.0
        %807 = vmatprep.subr.mxu0 0.0
        %808 = vmatpush1.msra.mxu0 0.0
        %809 = vmatprep.subr.mxu0 0.0
        %810 = vmatpush1.msra.mxu0 0.0
        %811 = vmatprep.subr.mxu0 0.0
        %812 = vmatpush1.msra.mxu0 0.0
        %813 = vmatprep.subr.mxu0 0.0
        %814 = vmatpush1.msra.mxu0 0.0
        %815 = vmatprep.subr.mxu0 0.0
        %816 = vmatpush1.msra.mxu0 0.0
        %817 = vmatprep.subr.mxu0 0.0
        %818 = vmatpush1.msra.mxu0 0.0
        %819 = vmatprep.subr.mxu0 0.0
        %820 = vmatpush1.msra.mxu0 0.0
        %821 = vmatprep.subr.mxu0 0.0
        %822 = vmatpush1.msra.mxu0 0.0
        %823 = vmatprep.subr.mxu0 0.0
        %824 = vmatpush1.msra.mxu0 0.0
        %825 = vmatprep.subr.mxu0 0.0
        %826 = vmatpush1.msra.mxu0 0.0
        %827 = vmatprep.subr.mxu0 0.0
        %828 = vmatpush1.msra.mxu0 0.0
        %829 = vmatprep.subr.mxu0 0.0
        %830 = vmatpush1.msra.mxu0 0.0
        %831 = vmatprep.subr.mxu0 0.0
        %832 = vmatpush1.msra.mxu0 0.0
        %833 = vmatprep.subr.mxu0 0.0
        %834 = vmatpush1.msra.mxu0 0.0
        %835 = vmatprep.subr.mxu0 0.0
        %836 = vmatpush1.msra.mxu0 0.0
        %837 = vmatprep.mubr.f32.mxu0 0.0
        %838 = vmatmul.mubr.f32.gmra.mrb[0].mxu0 %v768
        %v839 = vpop.f32.mrb[0].mxu0
        %v840 = vadd.f32 %v738, %v839
        %v841 = vpop.f32.mrb[0].mxu0
        %842 = vmatprep.mubr.f32.mxu0 0.0
        %843 = vmatmul.mubr.f32.gmra.mrb[0].mxu0 %v771
        %v844 = vpop.f32.mrb[0].mxu0
        %v845 = vadd.f32 %v743, %v844
        %v846 = vpop.f32.mrb[0].mxu0
        %847 = vdwg.mxu0
        %v848 = vmax.f32 %v840, 0.0
        %v849 = vmax.f32 %v845, 0.0
        %v850 = vadd.f32 %v848, %v562
        %v851 = vadd.f32 %v849, %v563
        %v852 = vmax.f32 %v850, 0.0
        %v853 = vmax.f32 %v851, 0.0
        %vm854 = vcmp.ge.s32.totalorder %v272, 4
        %v855 = vsel %vm854, 1, 0
        %v856 = vcvt.s32.f32 %v855
        %857 = vst [vmem:[#allocation2 + $0x8] sm:$0xff] %v852
        %858 = vst [vmem:[#allocation2 + $0x18] sm:$0xff] %v853
        %v859 = vld [vmem:[#allocation2] sm:$0xff]
        %v860 = vld [vmem:[#allocation2 + $0x8] sm:$0xff]
        %v861 = vld [vmem:[#allocation2 + $0x10] sm:$0xff]
        %v862 = vld [vmem:[#allocation2 + $0x18] sm:$0xff]
        %v864 = vlaneseq
        %v865 = vshrl.u32 %v864, 7
        %v866 = vsub.s32 0, %v865
        %v867 = vrot.slane %v856, %v866
        %868 = vrot.lane.b32.xlu0 %v867, 124
        %v869 = vpop.permute.xlu0 %868
        %v871 = vmul.f32 %v859, %v869
        %v872 = vmul.f32 %v860, %v869
        %v873 = vmul.f32 %v861, %v869
        %v874 = vmul.f32 %v862, %v869
        %877 = vrot.lane.b32.xlu0 %v852, 124
        %v878 = vpop.permute.xlu0 %877
        %879 = vrot.lane.b32.xlu0 %v853, 124
        %v880 = vpop.permute.xlu0 %879
        %s881 = scalar_lea.vmem %s261, 64
        %v882 = vld [vmem:[%s881] sm:$0xff]
        %v883 = vld [vmem:[%s881 + $0x8] sm:$0xff]
        %s884 = scalar_lea.vmem %s266, 64
        %v885 = vld [vmem:[%s884] sm:$0xff]
        %v886 = vld [vmem:[%s884 + $0x8] sm:$0xff]
        %888 = vset.pattern.permute.xlu0 0
        %889 = vperm.xlu0 %888, %v885
        %v890 = vpop.permute.xlu0 %889
        %893 = vset.pattern.permute.xlu0 0
        %894 = vperm.xlu0 %893, %v886
        %v895 = vpop.permute.xlu0 %894
        %901 = vrot.lane.b32.xlu0 %v871, 4
        %v902 = vpop.permute.xlu0 %901
        %903 = vrot.lane.b32.xlu0 %v872, 4
        %v904 = vpop.permute.xlu0 %903
        %905 = vrot.lane.b32.xlu0 %v873, 4
        %v906 = vpop.permute.xlu0 %905
        %907 = vrot.lane.b32.xlu0 %v874, 4
        %v908 = vpop.permute.xlu0 %907
        %909 = vrot.lane.b32.xlu0 %v878, 4
        %v910 = vpop.permute.xlu0 %909
        %911 = vrot.lane.b32.xlu0 %v880, 4
        %v912 = vpop.permute.xlu0 %911
        %vm913 = vcmask 31744
        %v914 = vsel %vm913, %v902, %v904
        %v915 = vsel %vm913, %v906, %v908
        %v921 = vsel %vm339, %v882, 0
        %v924 = vsel %vm339, %v883, 0
        %926 = vmatprep.subr.mxu0 0.0
        %927 = vmatpush1.msra.mxu0 %v914
        %928 = vmatprep.subr.mxu0 0.0
        %929 = vmatpush1.msra.mxu0 %v915
        %930 = vmatprep.subr.mxu0 0.0
        %931 = vmatpush1.msra.mxu0 %v910
        %932 = vmatprep.subr.mxu0 0.0
        %933 = vmatpush1.msra.mxu0 %v912
        %934 = vmatprep.subr.mxu0 0.0
        %935 = vmatpush1.msra.mxu0 0.0
        %936 = vmatprep.subr.mxu0 0.0
        %937 = vmatpush1.msra.mxu0 0.0
        %938 = vmatprep.subr.mxu0 0.0
        %939 = vmatpush1.msra.mxu0 0.0
        %940 = vmatprep.subr.mxu0 0.0
        %941 = vmatpush1.msra.mxu0 0.0
        %942 = vmatprep.subr.mxu0 0.0
        %943 = vmatpush1.msra.mxu0 0.0
        %944 = vmatprep.subr.mxu0 0.0
        %945 = vmatpush1.msra.mxu0 0.0
        %946 = vmatprep.subr.mxu0 0.0
        %947 = vmatpush1.msra.mxu0 0.0
        %948 = vmatprep.subr.mxu0 0.0
        %949 = vmatpush1.msra.mxu0 0.0
        %950 = vmatprep.subr.mxu0 0.0
        %951 = vmatpush1.msra.mxu0 0.0
        %952 = vmatprep.subr.mxu0 0.0
        %953 = vmatpush1.msra.mxu0 0.0
        %954 = vmatprep.subr.mxu0 0.0
        %955 = vmatpush1.msra.mxu0 0.0
        %956 = vmatprep.subr.mxu0 0.0
        %957 = vmatpush1.msra.mxu0 0.0
        %958 = vmatprep.subr.mxu0 0.0
        %959 = vmatpush1.msra.mxu0 0.0
        %960 = vmatprep.subr.mxu0 0.0
        %961 = vmatpush1.msra.mxu0 0.0
        %962 = vmatprep.subr.mxu0 0.0
        %963 = vmatpush1.msra.mxu0 0.0
        %964 = vmatprep.subr.mxu0 0.0
        %965 = vmatpush1.msra.mxu0 0.0
        %966 = vmatprep.subr.mxu0 0.0
        %967 = vmatpush1.msra.mxu0 0.0
        %968 = vmatprep.subr.mxu0 0.0
        %969 = vmatpush1.msra.mxu0 0.0
        %970 = vmatprep.subr.mxu0 0.0
        %971 = vmatpush1.msra.mxu0 0.0
        %972 = vmatprep.subr.mxu0 0.0
        %973 = vmatpush1.msra.mxu0 0.0
        %974 = vmatprep.subr.mxu0 0.0
        %975 = vmatpush1.msra.mxu0 0.0
        %976 = vmatprep.subr.mxu0 0.0
        %977 = vmatpush1.msra.mxu0 0.0
        %978 = vmatprep.subr.mxu0 0.0
        %979 = vmatpush1.msra.mxu0 0.0
        %980 = vmatprep.subr.mxu0 0.0
        %981 = vmatpush1.msra.mxu0 0.0
        %982 = vmatprep.subr.mxu0 0.0
        %983 = vmatpush1.msra.mxu0 0.0
        %984 = vmatprep.subr.mxu0 0.0
        %985 = vmatpush1.msra.mxu0 0.0
        %986 = vmatprep.subr.mxu0 0.0
        %987 = vmatpush1.msra.mxu0 0.0
        %988 = vmatprep.subr.mxu0 0.0
        %989 = vmatpush1.msra.mxu0 0.0
        %990 = vmatprep.mubr.f32.mxu0 0.0
        %991 = vmatmul.mubr.f32.gmra.mrb[0].mxu0 %v921
        %v992 = vpop.f32.mrb[0].mxu0
        %v993 = vadd.f32 %v890, %v992
        %v994 = vpop.f32.mrb[0].mxu0
        %995 = vmatprep.mubr.f32.mxu0 0.0
        %996 = vmatmul.mubr.f32.gmra.mrb[0].mxu0 %v924
        %v997 = vpop.f32.mrb[0].mxu0
        %v998 = vadd.f32 %v895, %v997
        %v999 = vpop.f32.mrb[0].mxu0
        %1000 = vdwg.mxu0
        %v1001 = vmax.f32 %v993, 0.0
        %v1002 = vmax.f32 %v998, 0.0
        %1003 = vst [vmem:[#allocation2 + $0x8] sm:$0xff] %v1001
        %1004 = vst [vmem:[#allocation2 + $0x18] sm:$0xff] %v1002
        %v1005 = vld [vmem:[#allocation2] sm:$0xff]
        %v1006 = vld [vmem:[#allocation2 + $0x8] sm:$0xff]
        %v1007 = vld [vmem:[#allocation2 + $0x10] sm:$0xff]
        %v1008 = vld [vmem:[#allocation2 + $0x18] sm:$0xff]
        %v1009 = vmul.f32 %v1005, %v869
        %v1010 = vmul.f32 %v1006, %v869
        %v1011 = vmul.f32 %v1007, %v869
        %v1012 = vmul.f32 %v1008, %v869
        %1015 = vrot.lane.b32.xlu0 %v1001, 124
        %v1016 = vpop.permute.xlu0 %1015
        %1017 = vrot.lane.b32.xlu0 %v1002, 124
        %v1018 = vpop.permute.xlu0 %1017
        %s1019 = scalar_lea.vmem %s261, 80
        %v1020 = vld [vmem:[%s1019] sm:$0xff]
        %v1021 = vld [vmem:[%s1019 + $0x8] sm:$0xff]
        %s1022 = scalar_lea.vmem %s266, 80
        %v1023 = vld [vmem:[%s1022] sm:$0xff]
        %v1024 = vld [vmem:[%s1022 + $0x8] sm:$0xff]
        %1026 = vset.pattern.permute.xlu0 0
        %1027 = vperm.xlu0 %1026, %v1023
        %v1028 = vpop.permute.xlu0 %1027
        %1031 = vset.pattern.permute.xlu0 0
        %1032 = vperm.xlu0 %1031, %v1024
        %v1033 = vpop.permute.xlu0 %1032
        %1039 = vrot.lane.b32.xlu0 %v1009, 4
        %v1040 = vpop.permute.xlu0 %1039
        %1041 = vrot.lane.b32.xlu0 %v1010, 4
        %v1042 = vpop.permute.xlu0 %1041
        %1043 = vrot.lane.b32.xlu0 %v1011, 4
        %v1044 = vpop.permute.xlu0 %1043
        %1045 = vrot.lane.b32.xlu0 %v1012, 4
        %v1046 = vpop.permute.xlu0 %1045
        %1047 = vrot.lane.b32.xlu0 %v1016, 4
        %v1048 = vpop.permute.xlu0 %1047
        %1049 = vrot.lane.b32.xlu0 %v1018, 4
        %v1050 = vpop.permute.xlu0 %1049
        %v1051 = vsel %vm913, %v1040, %v1042
        %v1052 = vsel %vm913, %v1044, %v1046
        %v1058 = vsel %vm339, %v1020, 0
        %v1061 = vsel %vm339, %v1021, 0
        %1063 = vmatprep.subr.mxu0 0.0
        %1064 = vmatpush1.msra.mxu0 %v1051
        %1065 = vmatprep.subr.mxu0 0.0
        %1066 = vmatpush1.msra.mxu0 %v1052
        %1067 = vmatprep.subr.mxu0 0.0
        %1068 = vmatpush1.msra.mxu0 %v1048
        %1069 = vmatprep.subr.mxu0 0.0
        %1070 = vmatpush1.msra.mxu0 %v1050
        %1071 = vmatprep.subr.mxu0 0.0
        %1072 = vmatpush1.msra.mxu0 0.0
        %1073 = vmatprep.subr.mxu0 0.0
        %1074 = vmatpush1.msra.mxu0 0.0
        %1075 = vmatprep.subr.mxu0 0.0
        %1076 = vmatpush1.msra.mxu0 0.0
        %1077 = vmatprep.subr.mxu0 0.0
        %1078 = vmatpush1.msra.mxu0 0.0
        %1079 = vmatprep.subr.mxu0 0.0
        %1080 = vmatpush1.msra.mxu0 0.0
        %1081 = vmatprep.subr.mxu0 0.0
        %1082 = vmatpush1.msra.mxu0 0.0
        %1083 = vmatprep.subr.mxu0 0.0
        %1084 = vmatpush1.msra.mxu0 0.0
        %1085 = vmatprep.subr.mxu0 0.0
        %1086 = vmatpush1.msra.mxu0 0.0
        %1087 = vmatprep.subr.mxu0 0.0
        %1088 = vmatpush1.msra.mxu0 0.0
        %1089 = vmatprep.subr.mxu0 0.0
        %1090 = vmatpush1.msra.mxu0 0.0
        %1091 = vmatprep.subr.mxu0 0.0
        %1092 = vmatpush1.msra.mxu0 0.0
        %1093 = vmatprep.subr.mxu0 0.0
        %1094 = vmatpush1.msra.mxu0 0.0
        %1095 = vmatprep.subr.mxu0 0.0
        %1096 = vmatpush1.msra.mxu0 0.0
        %1097 = vmatprep.subr.mxu0 0.0
        %1098 = vmatpush1.msra.mxu0 0.0
        %1099 = vmatprep.subr.mxu0 0.0
        %1100 = vmatpush1.msra.mxu0 0.0
        %1101 = vmatprep.subr.mxu0 0.0
        %1102 = vmatpush1.msra.mxu0 0.0
        %1103 = vmatprep.subr.mxu0 0.0
        %1104 = vmatpush1.msra.mxu0 0.0
        %1105 = vmatprep.subr.mxu0 0.0
        %1106 = vmatpush1.msra.mxu0 0.0
        %1107 = vmatprep.subr.mxu0 0.0
        %1108 = vmatpush1.msra.mxu0 0.0
        %1109 = vmatprep.subr.mxu0 0.0
        %1110 = vmatpush1.msra.mxu0 0.0
        %1111 = vmatprep.subr.mxu0 0.0
        %1112 = vmatpush1.msra.mxu0 0.0
        %1113 = vmatprep.subr.mxu0 0.0
        %1114 = vmatpush1.msra.mxu0 0.0
        %1115 = vmatprep.subr.mxu0 0.0
        %1116 = vmatpush1.msra.mxu0 0.0
        %1117 = vmatprep.subr.mxu0 0.0
        %1118 = vmatpush1.msra.mxu0 0.0
        %1119 = vmatprep.subr.mxu0 0.0
        %1120 = vmatpush1.msra.mxu0 0.0
        %1121 = vmatprep.subr.mxu0 0.0
        %1122 = vmatpush1.msra.mxu0 0.0
        %1123 = vmatprep.subr.mxu0 0.0
        %1124 = vmatpush1.msra.mxu0 0.0
        %1125 = vmatprep.subr.mxu0 0.0
        %1126 = vmatpush1.msra.mxu0 0.0
        %1127 = vmatprep.mubr.f32.mxu0 0.0
        %1128 = vmatmul.mubr.f32.gmra.mrb[0].mxu0 %v1058
        %v1129 = vpop.f32.mrb[0].mxu0
        %v1130 = vadd.f32 %v1028, %v1129
        %v1131 = vpop.f32.mrb[0].mxu0
        %1132 = vmatprep.mubr.f32.mxu0 0.0
        %1133 = vmatmul.mubr.f32.gmra.mrb[0].mxu0 %v1061
        %v1134 = vpop.f32.mrb[0].mxu0
        %v1135 = vadd.f32 %v1033, %v1134
        %v1136 = vpop.f32.mrb[0].mxu0
        %1137 = vdwg.mxu0
        %v1138 = vmax.f32 %v1130, 0.0
        %v1139 = vmax.f32 %v1135, 0.0
        %v1140 = vadd.f32 %v1138, %v852
        %v1141 = vadd.f32 %v1139, %v853
        %v1142 = vmax.f32 %v1140, 0.0
        %v1143 = vmax.f32 %v1141, 0.0
        %1144 = vst [vmem:[%s256] sm:$0xff] %v1142
        %1145 = vst [vmem:[%s256 + $0x8] sm:$0xff] %v1143
        %s1146 = sand.u32 %s133, 1
        %s1147 = scalar_lea.sflag [#allocation5], %s1146
        %s1148 = sand.u32 %s133, 1
        %s1149 = smul.addr %s1148, 16
        %s1150 = scalar_lea.vmem [#allocation6], %s1149
        // Predicated region
        $region41: #{tpu_custom_call.1} parent=35 // pred_check
          %p1151 = pneg %p143
        $region42: #{tpu_custom_call.1} parent=35 // pred_check_branch
          %1153 = sbr.rel (%p1151) target = $region44
        $region43: #{tpu_custom_call.1} parent=35 // pred_region
          %s1155 = ssub.s32 256, 256
          %1156 = vsyncadd %s1147, %s1155
          %s1157 = smul.addr %s21, 2
          %s1158 = smul.addr %s1157, 128
          %s1159 = scalar_lea.hbm %s4, %s1158
          %s1160 = sshll.u32 %s1150, 4
          %s1161 = int_to_ptr.vmem [resolvable:$true] %s1160
          %1166 = dma.vmem_to_hbm [thread:$0]  %s1161, 256, %s1159, %s1147, 128, 128, 8
        $region44: #{tpu_custom_call.1} parent=35 // pred_fallthru
          _
      $region36: #{tpu_custom_call.1} parent=5 // pred_fallthru
        _
      %p1167 = scmp.le.s32.totalorder 2, %s16
      // Predicated region
      $region45: #{tpu_custom_call.1} parent=5 // pred_check
        %p1168 = pneg %p1167
      $region46: #{tpu_custom_call.1} parent=5 // pred_check_branch
        %1170 = sbr.rel (%p1168) target = $region48
      $region47: #{tpu_custom_call.1} parent=5 // pred_region
        %s1171 = ssub.s32 %s16, 2
        // Predicated region
        $region49: #{tpu_custom_call.1} parent=47 // pred_check
          %p1172 = pneg %p149
        $region50: #{tpu_custom_call.1} parent=47 // pred_check_branch
          %1174 = sbr.rel (%p1172) target = $region52
        $region51: #{tpu_custom_call.1} parent=47 // pred_region
          %s1175 = sand.u32 %s134, 1
          %s1176 = scalar_lea.sflag [#allocation5], %s1175
          %s1177 = sand.u32 %s134, 1
          %s1178 = smul.addr %s1177, 16
          %s1179 = scalar_lea.vmem [#allocation6], %s1178
          %1180 = dma.done %s1176, 256
        $region52: #{tpu_custom_call.1} parent=47 // pred_fallthru
          _
      $region48: #{tpu_custom_call.1} parent=5 // pred_fallthru
        _
    $region6: #{tpu_custom_call.1} parent=1 // loop_footer
      %s20 = sadd.s32 1, %s16
    $region7: #{tpu_custom_call.1} parent=1 // loop_footer_branch
      %15 = sbr.rel target = $region3
    $region8: #{tpu_custom_call.1} parent=1 // loop_exit
      _
    %1181 = vsyncpa [#allocation4], 1
    %s1182 = scalar_lea.sflag [#allocation4], 1
    %1183 = vsyncpa %s1182, 1
    %1184 = vsyncpa [#allocation5], 1
    %s1185 = scalar_lea.sflag [#allocation5], 1
    %1186 = vsyncpa %s1185, 1

</llo_original>
